<compile_context>
chip_gen: v5e
topology: v5e:2x2
jax: 0.10.0
libtpu: 0.0.40
codegen_flags: <defaults>
</compile_context>

<pallas_src>
import functools

import jax
import jax.numpy as jnp
from jax.experimental import pallas as pl
from jax.experimental.pallas import tpu as pltpu

NC_PAD = 128  # lane-dense output width


def resnet_head_kernel(x_ref, w1_ref, w2_ref, wskip_ref, wout_ref, bias_ref,
                       o_ref, *, L, K, pad, ngf, rows):
    """One grid block = `rows` rows (a whole number of sequences of length L)."""
    x = x_ref[...]                                          # (rows, nz) f32
    bias = bias_ref[...]                                    # (3, NC_PAD) f32
    l_idx = jax.lax.broadcasted_iota(jnp.int32, (rows, 1), 0) % L

    def tap(a, s):
        # row r of the result holds a[r + s]; rows whose (l + s) leaves the
        # sequence are zeroed (handles 'same' padding and batch boundaries).
        if s == 0:
            return a
        at = pltpu.roll(a, shift=(-s) % rows, axis=0)       # XLU sublane roll
        valid = jnp.logical_and(l_idx + s >= 0, l_idx + s < L)
        return jnp.where(valid, at, jnp.zeros_like(at))

    # ---- conv1: K accumulating (rows, nz) @ (nz, ngf) dots, bias, ReLU (f32)
    acc1 = jnp.zeros((rows, ngf), jnp.float32)
    for t in range(K):                                      # static unroll
        xt = tap(x, t - pad).astype(jnp.bfloat16)
        acc1 = acc1 + jnp.dot(xt, w1_ref[t], preferred_element_type=jnp.float32)
    h1 = jnp.maximum(acc1 + bias[0:1, :ngf], 0.0)           # (rows, ngf) f32

    # ---- conv2 + 1x1 skip: K+1 accumulating dots, fused bias (b2+bskip), ReLU
    acc2 = jnp.dot(x.astype(jnp.bfloat16), wskip_ref[...],
                   preferred_element_type=jnp.float32)
    for t in range(K):
        ht = tap(h1, t - pad).astype(jnp.bfloat16)
        acc2 = acc2 + jnp.dot(ht, w2_ref[t], preferred_element_type=jnp.float32)
    h = jnp.maximum(acc2 + bias[1:2, :ngf], 0.0)            # (rows, ngf) f32

    # ---- OutConv 1x1 (ngf -> nc, padded to 128 lanes -> dense store)
    out = jnp.dot(h.astype(jnp.bfloat16), wout_ref[...],
                  preferred_element_type=jnp.float32) + bias[2:3, :]
    o_ref[...] = out.astype(o_ref.dtype)


def fold_params(params, kernel_size, nc):
    """Once-per-parameter-set folding: bf16 weights, padded out-weight, packed biases."""
    w1, b1, w2, b2, wskip, bskip, wout, bout = params
    ngf = w1.shape[2]
    assert nc <= NC_PAD
    w1b = w1.astype(jnp.bfloat16)                           # (K, nz, ngf)
    w2b = w2.astype(jnp.bfloat16)                           # (K, ngf, ngf)
    wskipb = wskip.astype(jnp.bfloat16)                     # (nz, ngf)
    woutp = (jnp.zeros((ngf, NC_PAD), jnp.float32)
             .at[:, :nc].set(wout).astype(jnp.bfloat16))    # (ngf, NC_PAD)
    biases = jnp.zeros((3, NC_PAD), jnp.float32)
    biases = biases.at[0, :ngf].set(b1[0])                  # conv1 bias
    biases = biases.at[1, :ngf].set((b2 + bskip)[0])        # conv2 + skip bias
    biases = biases.at[2, :nc].set(bout[0])                 # out-conv bias (padded)
    return (w1b, w2b, wskipb, woutp, biases)


def resnet_head_forward(x_ncl, folded, kernel_size, nc, *, batches_per_block=None):
    """x_ncl: (B, nz, L) float32 (PyTorch Conv1d layout). Returns (B, nc, L) f32."""
    w1b, w2b, wskipb, woutp, biases = folded
    K = kernel_size
    assert K % 2 == 1, "odd kernel_size assumed (symmetric 'same' padding)"
    pad = (K - 1) // 2
    B, nz, L = x_ncl.shape
    _, _, ngf = w1b.shape
    BL = B * L

    # Block = whole sequences; >=2 parallel blocks when possible (v7x has 2 TCs),
    # aiming at a few hundred rows per block once the problem is big enough.
    bpb = batches_per_block
    if bpb is None:
        bpb = max(1, min(B, (512 // L) if L < 512 else 1))
        if B >= 2 and bpb > B // 2:
            bpb = max(1, B // 2)
    while B % bpb:
        bpb -= 1
    rows = bpb * L
    if rows % 8 != 0 and bpb != B:          # (8,128) sublane rule for partial blocks
        bpb, rows = B, BL                   # single full-extent block (exempt)
    num_blocks = B // bpb

    # NCL -> (B*L, nz); all other prep lives in fold_params / in-kernel.
    x_flat = jnp.transpose(x_ncl, (0, 2, 1)).reshape(BL, nz).astype(jnp.float32)

    kern = functools.partial(resnet_head_kernel,
                             L=L, K=K, pad=pad, ngf=ngf, rows=rows)

    out_flat = pl.pallas_call(
        kern,
        out_shape=jax.ShapeDtypeStruct((BL, NC_PAD), jnp.float32),
        grid=(num_blocks,),
        in_specs=[
            pl.BlockSpec((rows, nz), lambda i: (i, 0)),        # x block (f32)
            pl.BlockSpec((K, nz, ngf), lambda i: (0, 0, 0)),   # conv1 taps (bf16)
            pl.BlockSpec((K, ngf, ngf), lambda i: (0, 0, 0)),  # conv2 taps (bf16)
            pl.BlockSpec((nz, ngf), lambda i: (0, 0)),         # skip 1x1 (bf16)
            pl.BlockSpec((ngf, NC_PAD), lambda i: (0, 0)),     # out 1x1, padded (bf16)
            pl.BlockSpec((3, NC_PAD), lambda i: (0, 0)),       # packed biases (f32)
        ],
        out_specs=pl.BlockSpec((rows, NC_PAD), lambda i: (i, 0)),
        compiler_params=pltpu.CompilerParams(dimension_semantics=("parallel",)),
    )(x_flat, w1b, w2b, wskipb, woutp, biases)

    out_nlc = out_flat[:, :nc].reshape(B, L, nc)
    return jnp.transpose(out_nlc, (0, 2, 1))                  # (B, nc, L)


def init_params(key, nz, ngf, nc, K):
    ks = jax.random.split(key, 8)
    scale = 0.1
    w1 = scale * jax.random.normal(ks[0], (K, nz, ngf), jnp.float32)
    b1 = scale * jax.random.normal(ks[1], (1, ngf), jnp.float32)
    w2 = scale * jax.random.normal(ks[2], (K, ngf, ngf), jnp.float32)
    b2 = scale * jax.random.normal(ks[3], (1, ngf), jnp.float32)
    wskip = scale * jax.random.normal(ks[4], (nz, ngf), jnp.float32)
    bskip = scale * jax.random.normal(ks[5], (1, ngf), jnp.float32)
    wout = scale * jax.random.normal(ks[6], (ngf, nc), jnp.float32)
    bout = scale * jax.random.normal(ks[7], (1, nc), jnp.float32)
    return (w1, b1, w2, b2, wskip, bskip, wout, bout)


def ref_forward(x_ncl, params, K):
    """Pure-JAX f32 reference with identical semantics (correctness check)."""
    w1, b1, w2, b2, wskip, bskip, wout, bout = params
    pad = (K - 1) // 2
    x = jnp.transpose(x_ncl, (0, 2, 1))
    L = x.shape[1]
    xp = jnp.pad(x, ((0, 0), (pad, pad), (0, 0)))
    acc1 = sum(jnp.einsum('blc,cf->blf', xp[:, t:t + L], w1[t]) for t in range(K)) + b1[0]
    h1 = jax.nn.relu(acc1)
    h1p = jnp.pad(h1, ((0, 0), (pad, pad), (0, 0)))
    acc2 = sum(jnp.einsum('blc,cf->blf', h1p[:, t:t + L], w2[t]) for t in range(K)) + b2[0]
    skip = jnp.einsum('blc,cf->blf', x, wskip) + bskip[0]
    h = jax.nn.relu(acc2 + skip)
    out = jnp.einsum('blc,cf->blf', h, wout) + bout[0]
    return jnp.transpose(out, (0, 2, 1))


if __name__ == "__main__":
    # Module hyperparameters (small, consistent with the forward pass).
    nz, ngf_in_out, nc, kernel_size = 4, 32, 8, 3
    B, L = 2, 16

    key = jax.random.PRNGKey(0)
    kx, kp = jax.random.split(key)
    x = jax.random.normal(kx, (B, nz, L), jnp.float32)           # NCL like PyTorch
    params = init_params(kp, nz, ngf_in_out, nc, kernel_size)

    # Weight folding happens once per parameter set, outside the per-call path.
    folded = fold_params(params, kernel_size, nc)

    fwd = jax.jit(lambda xv, fv: resnet_head_forward(xv, fv, kernel_size, nc))
    out = jax.block_until_ready(fwd(x, folded))

    ref = ref_forward(x, params, kernel_size)
    assert out.shape == (B, nc, L)
    # bf16 matmul operands -> loosened tolerance vs the f32 reference.
    assert jnp.allclose(out, ref, atol=3e-2, rtol=3e-2), \
        float(jnp.max(jnp.abs(out - ref)))

    print("KERNEL_OK")
</pallas_src>

<mosaic_0001>
module attributes {stable_mosaic.version = 11 : i64} {
  func.func @resnet_head_kernel(%arg0: i32, %arg1: memref<16x4xf32, #tpu.memory_space<vmem>>, %arg2: memref<3x4x32xbf16, #tpu.memory_space<vmem>>, %arg3: memref<3x32x32xbf16, #tpu.memory_space<vmem>>, %arg4: memref<4x32xbf16, #tpu.memory_space<vmem>>, %arg5: memref<32x128xbf16, #tpu.memory_space<vmem>>, %arg6: memref<3x128xf32, #tpu.memory_space<vmem>>, %arg7: memref<16x128xf32, #tpu.memory_space<vmem>>) attributes {dimension_semantics = [#tpu.dimension_semantics<parallel>], iteration_bounds = array<i64: 2>, scalar_prefetch = 0 : i64, scratch_operands = 0 : i64, tpu.core_type = #tpu.core_type<tc>, window_params = [{transform_indices = @transform_0, window_bounds = array<i64: 16, 4>}, {pipeline_mode = #tpu.pipeline_mode<synchronous>, transform_indices = @transform_1, window_bounds = array<i64: 3, 4, 32>}, {pipeline_mode = #tpu.pipeline_mode<synchronous>, transform_indices = @transform_2, window_bounds = array<i64: 3, 32, 32>}, {pipeline_mode = #tpu.pipeline_mode<synchronous>, transform_indices = @transform_3, window_bounds = array<i64: 4, 32>}, {pipeline_mode = #tpu.pipeline_mode<synchronous>, transform_indices = @transform_4, window_bounds = array<i64: 32, 128>}, {pipeline_mode = #tpu.pipeline_mode<synchronous>, transform_indices = @transform_5, window_bounds = array<i64: 3, 128>}, {transform_indices = @transform_6, window_bounds = array<i64: 16, 128>}]} {
    %c0 = arith.constant 0 : index
    %c0_0 = arith.constant 0 : index
    %0 = vector.load %arg1[%c0, %c0_0] : memref<16x4xf32, #tpu.memory_space<vmem>>, vector<16x4xf32>
    %c0_1 = arith.constant 0 : index
    %c0_2 = arith.constant 0 : index
    %1 = vector.load %arg6[%c0_1, %c0_2] : memref<3x128xf32, #tpu.memory_space<vmem>>, vector<3x128xf32>
    %2 = tpu.iota {dimensions = array<i32: 0>} : vector<16x1xi32>
    %c16_i32 = arith.constant 16 : i32
    %c0_i32 = arith.constant 0 : i32
    %3 = arith.cmpi eq, %c16_i32, %c0_i32 : i32
    %c1_i32 = arith.constant 1 : i32
    %4 = arith.select %3, %c1_i32, %c16_i32 : i32
    %5 = vector.broadcast %4 : i32 to vector<16x1xi32>
    %6 = arith.remsi %2, %5 : vector<16x1xi32>
    %c0_i32_3 = arith.constant 0 : i32
    %7 = vector.broadcast %c0_i32_3 : i32 to vector<16x1xi32>
    %8 = arith.cmpi ne, %6, %7 : vector<16x1xi32>
    %c0_i32_4 = arith.constant 0 : i32
    %9 = vector.broadcast %c0_i32_4 : i32 to vector<16x1xi32>
    %10 = arith.cmpi slt, %6, %9 : vector<16x1xi32>
    %c0_i32_5 = arith.constant 0 : i32
    %11 = arith.cmpi slt, %4, %c0_i32_5 : i32
    %12 = vector.broadcast %11 : i1 to vector<16x1xi1>
    %13 = vector.broadcast %12 : vector<16x1xi1> to vector<16x1xi1>
    %14 = arith.xori %10, %13 : vector<16x1xi1>
    %15 = arith.andi %14, %8 : vector<16x1xi1>
    %16 = vector.broadcast %4 : i32 to vector<16x1xi32>
    %17 = arith.addi %6, %16 : vector<16x1xi32>
    %18 = arith.select %15, %17, %6 : vector<16x1xi1>, vector<16x1xi32>
    %cst = arith.constant 0.000000e+00 : f32
    %19 = vector.broadcast %cst : f32 to vector<16x32xf32>
    %c1_i32_6 = arith.constant 1 : i32
    %20 = tpu.dynamic_rotate %0 by %c1_i32_6 dim 0 : vector<16x4xf32>, i32 -> vector<16x4xf32>
    %c-1_i32 = arith.constant -1 : i32
    %21 = vector.broadcast %c-1_i32 : i32 to vector<16x1xi32>
    %22 = arith.addi %18, %21 : vector<16x1xi32>
    %c0_i32_7 = arith.constant 0 : i32
    %23 = vector.broadcast %c0_i32_7 : i32 to vector<16x1xi32>
    %24 = arith.cmpi sge, %22, %23 : vector<16x1xi32>
    %c-1_i32_8 = arith.constant -1 : i32
    %25 = vector.broadcast %c-1_i32_8 : i32 to vector<16x1xi32>
    %26 = arith.addi %18, %25 : vector<16x1xi32>
    %c16_i32_9 = arith.constant 16 : i32
    %27 = vector.broadcast %c16_i32_9 : i32 to vector<16x1xi32>
    %28 = arith.cmpi slt, %26, %27 : vector<16x1xi32>
    %29 = arith.andi %24, %28 : vector<16x1xi1>
    %cst_10 = arith.constant 0.000000e+00 : f32
    %30 = vector.broadcast %cst_10 : f32 to vector<16x4xf32>
    %31 = vector.shape_cast %29 : vector<16x1xi1> to vector<16x1xi1>
    %32 = vector.broadcast %31 : vector<16x1xi1> to vector<16x4xi1>
    %33 = arith.select %32, %20, %30 : vector<16x4xi1>, vector<16x4xf32>
    %34 = arith.truncf %33 : vector<16x4xf32> to vector<16x4xbf16>
    %c0_11 = arith.constant 0 : index
    %c0_12 = arith.constant 0 : index
    %c0_13 = arith.constant 0 : index
    %35 = vector.load %arg2[%c0_11, %c0_12, %c0_13] : memref<3x4x32xbf16, #tpu.memory_space<vmem>>, vector<1x4x32xbf16>
    %36 = vector.shape_cast %35 : vector<1x4x32xbf16> to vector<4x32xbf16>
    %cst_14 = arith.constant dense<0.000000e+00> : vector<16x32xf32>
    %37 = tpu.matmul %34, %36, %cst_14 {dimension_numbers = #tpu.dot_dimension_numbers<[1], [0], [0], [1], [0, 0, 1, 1], [], []>} : vector<16x4xbf16>, vector<4x32xbf16>, vector<16x32xf32> -> vector<16x32xf32>
    %38 = arith.addf %19, %37 : vector<16x32xf32>
    %39 = arith.truncf %0 : vector<16x4xf32> to vector<16x4xbf16>
    %c1 = arith.constant 1 : index
    %c0_15 = arith.constant 0 : index
    %c0_16 = arith.constant 0 : index
    %40 = vector.load %arg2[%c1, %c0_15, %c0_16] : memref<3x4x32xbf16, #tpu.memory_space<vmem>>, vector<1x4x32xbf16>
    %41 = vector.shape_cast %40 : vector<1x4x32xbf16> to vector<4x32xbf16>
    %cst_17 = arith.constant dense<0.000000e+00> : vector<16x32xf32>
    %42 = tpu.matmul %39, %41, %cst_17 {dimension_numbers = #tpu.dot_dimension_numbers<[1], [0], [0], [1], [0, 0, 1, 1], [], []>} : vector<16x4xbf16>, vector<4x32xbf16>, vector<16x32xf32> -> vector<16x32xf32>
    %43 = arith.addf %38, %42 : vector<16x32xf32>
    %c15_i32 = arith.constant 15 : i32
    %44 = tpu.dynamic_rotate %0 by %c15_i32 dim 0 : vector<16x4xf32>, i32 -> vector<16x4xf32>
    %c1_i32_18 = arith.constant 1 : i32
    %45 = vector.broadcast %c1_i32_18 : i32 to vector<16x1xi32>
    %46 = arith.addi %18, %45 : vector<16x1xi32>
    %c0_i32_19 = arith.constant 0 : i32
    %47 = vector.broadcast %c0_i32_19 : i32 to vector<16x1xi32>
    %48 = arith.cmpi sge, %46, %47 : vector<16x1xi32>
    %c1_i32_20 = arith.constant 1 : i32
    %49 = vector.broadcast %c1_i32_20 : i32 to vector<16x1xi32>
    %50 = arith.addi %18, %49 : vector<16x1xi32>
    %c16_i32_21 = arith.constant 16 : i32
    %51 = vector.broadcast %c16_i32_21 : i32 to vector<16x1xi32>
    %52 = arith.cmpi slt, %50, %51 : vector<16x1xi32>
    %53 = arith.andi %48, %52 : vector<16x1xi1>
    %cst_22 = arith.constant 0.000000e+00 : f32
    %54 = vector.broadcast %cst_22 : f32 to vector<16x4xf32>
    %55 = vector.shape_cast %53 : vector<16x1xi1> to vector<16x1xi1>
    %56 = vector.broadcast %55 : vector<16x1xi1> to vector<16x4xi1>
    %57 = arith.select %56, %44, %54 : vector<16x4xi1>, vector<16x4xf32>
    %58 = arith.truncf %57 : vector<16x4xf32> to vector<16x4xbf16>
    %c2 = arith.constant 2 : index
    %c0_23 = arith.constant 0 : index
    %c0_24 = arith.constant 0 : index
    %59 = vector.load %arg2[%c2, %c0_23, %c0_24] : memref<3x4x32xbf16, #tpu.memory_space<vmem>>, vector<1x4x32xbf16>
    %60 = vector.shape_cast %59 : vector<1x4x32xbf16> to vector<4x32xbf16>
    %cst_25 = arith.constant dense<0.000000e+00> : vector<16x32xf32>
    %61 = tpu.matmul %58, %60, %cst_25 {dimension_numbers = #tpu.dot_dimension_numbers<[1], [0], [0], [1], [0, 0, 1, 1], [], []>} : vector<16x4xbf16>, vector<4x32xbf16>, vector<16x32xf32> -> vector<16x32xf32>
    %62 = arith.addf %43, %61 : vector<16x32xf32>
    %63 = vector.extract_strided_slice %1 {offsets = [0, 0], sizes = [1, 32], strides = [1, 1]} : vector<3x128xf32> to vector<1x32xf32>
    %64 = vector.broadcast %63 : vector<1x32xf32> to vector<16x32xf32>
    %65 = arith.addf %62, %64 : vector<16x32xf32>
    %cst_26 = arith.constant 0.000000e+00 : f32
    %66 = vector.broadcast %cst_26 : f32 to vector<16x32xf32>
    %67 = arith.maximumf %65, %66 : vector<16x32xf32>
    %68 = arith.truncf %0 : vector<16x4xf32> to vector<16x4xbf16>
    %c0_27 = arith.constant 0 : index
    %c0_28 = arith.constant 0 : index
    %69 = vector.load %arg4[%c0_27, %c0_28] : memref<4x32xbf16, #tpu.memory_space<vmem>>, vector<4x32xbf16>
    %cst_29 = arith.constant dense<0.000000e+00> : vector<16x32xf32>
    %70 = tpu.matmul %68, %69, %cst_29 {dimension_numbers = #tpu.dot_dimension_numbers<[1], [0], [0], [1], [0, 0, 1, 1], [], []>} : vector<16x4xbf16>, vector<4x32xbf16>, vector<16x32xf32> -> vector<16x32xf32>
    %c1_i32_30 = arith.constant 1 : i32
    %71 = tpu.dynamic_rotate %67 by %c1_i32_30 dim 0 : vector<16x32xf32>, i32 -> vector<16x32xf32>
    %c-1_i32_31 = arith.constant -1 : i32
    %72 = vector.broadcast %c-1_i32_31 : i32 to vector<16x1xi32>
    %73 = arith.addi %18, %72 : vector<16x1xi32>
    %c0_i32_32 = arith.constant 0 : i32
    %74 = vector.broadcast %c0_i32_32 : i32 to vector<16x1xi32>
    %75 = arith.cmpi sge, %73, %74 : vector<16x1xi32>
    %c-1_i32_33 = arith.constant -1 : i32
    %76 = vector.broadcast %c-1_i32_33 : i32 to vector<16x1xi32>
    %77 = arith.addi %18, %76 : vector<16x1xi32>
    %c16_i32_34 = arith.constant 16 : i32
    %78 = vector.broadcast %c16_i32_34 : i32 to vector<16x1xi32>
    %79 = arith.cmpi slt, %77, %78 : vector<16x1xi32>
    %80 = arith.andi %75, %79 : vector<16x1xi1>
    %cst_35 = arith.constant 0.000000e+00 : f32
    %81 = vector.broadcast %cst_35 : f32 to vector<16x32xf32>
    %82 = vector.shape_cast %80 : vector<16x1xi1> to vector<16x1xi1>
    %83 = vector.broadcast %82 : vector<16x1xi1> to vector<16x32xi1>
    %84 = arith.select %83, %71, %81 : vector<16x32xi1>, vector<16x32xf32>
    %85 = arith.truncf %84 : vector<16x32xf32> to vector<16x32xbf16>
    %c0_36 = arith.constant 0 : index
    %c0_37 = arith.constant 0 : index
    %c0_38 = arith.constant 0 : index
    %86 = vector.load %arg3[%c0_36, %c0_37, %c0_38] : memref<3x32x32xbf16, #tpu.memory_space<vmem>>, vector<1x32x32xbf16>
    %87 = vector.shape_cast %86 : vector<1x32x32xbf16> to vector<32x32xbf16>
    %cst_39 = arith.constant dense<0.000000e+00> : vector<16x32xf32>
    %88 = tpu.matmul %85, %87, %cst_39 {dimension_numbers = #tpu.dot_dimension_numbers<[1], [0], [0], [1], [0, 0, 1, 1], [], []>} : vector<16x32xbf16>, vector<32x32xbf16>, vector<16x32xf32> -> vector<16x32xf32>
    %89 = arith.addf %70, %88 : vector<16x32xf32>
    %90 = arith.truncf %67 : vector<16x32xf32> to vector<16x32xbf16>
    %c1_40 = arith.constant 1 : index
    %c0_41 = arith.constant 0 : index
    %c0_42 = arith.constant 0 : index
    %91 = vector.load %arg3[%c1_40, %c0_41, %c0_42] : memref<3x32x32xbf16, #tpu.memory_space<vmem>>, vector<1x32x32xbf16>
    %92 = vector.shape_cast %91 : vector<1x32x32xbf16> to vector<32x32xbf16>
    %cst_43 = arith.constant dense<0.000000e+00> : vector<16x32xf32>
    %93 = tpu.matmul %90, %92, %cst_43 {dimension_numbers = #tpu.dot_dimension_numbers<[1], [0], [0], [1], [0, 0, 1, 1], [], []>} : vector<16x32xbf16>, vector<32x32xbf16>, vector<16x32xf32> -> vector<16x32xf32>
    %94 = arith.addf %89, %93 : vector<16x32xf32>
    %c15_i32_44 = arith.constant 15 : i32
    %95 = tpu.dynamic_rotate %67 by %c15_i32_44 dim 0 : vector<16x32xf32>, i32 -> vector<16x32xf32>
    %c1_i32_45 = arith.constant 1 : i32
    %96 = vector.broadcast %c1_i32_45 : i32 to vector<16x1xi32>
    %97 = arith.addi %18, %96 : vector<16x1xi32>
    %c0_i32_46 = arith.constant 0 : i32
    %98 = vector.broadcast %c0_i32_46 : i32 to vector<16x1xi32>
    %99 = arith.cmpi sge, %97, %98 : vector<16x1xi32>
    %c1_i32_47 = arith.constant 1 : i32
    %100 = vector.broadcast %c1_i32_47 : i32 to vector<16x1xi32>
    %101 = arith.addi %18, %100 : vector<16x1xi32>
    %c16_i32_48 = arith.constant 16 : i32
    %102 = vector.broadcast %c16_i32_48 : i32 to vector<16x1xi32>
    %103 = arith.cmpi slt, %101, %102 : vector<16x1xi32>
    %104 = arith.andi %99, %103 : vector<16x1xi1>
    %cst_49 = arith.constant 0.000000e+00 : f32
    %105 = vector.broadcast %cst_49 : f32 to vector<16x32xf32>
    %106 = vector.shape_cast %104 : vector<16x1xi1> to vector<16x1xi1>
    %107 = vector.broadcast %106 : vector<16x1xi1> to vector<16x32xi1>
    %108 = arith.select %107, %95, %105 : vector<16x32xi1>, vector<16x32xf32>
    %109 = arith.truncf %108 : vector<16x32xf32> to vector<16x32xbf16>
    %c2_50 = arith.constant 2 : index
    %c0_51 = arith.constant 0 : index
    %c0_52 = arith.constant 0 : index
    %110 = vector.load %arg3[%c2_50, %c0_51, %c0_52] : memref<3x32x32xbf16, #tpu.memory_space<vmem>>, vector<1x32x32xbf16>
    %111 = vector.shape_cast %110 : vector<1x32x32xbf16> to vector<32x32xbf16>
    %cst_53 = arith.constant dense<0.000000e+00> : vector<16x32xf32>
    %112 = tpu.matmul %109, %111, %cst_53 {dimension_numbers = #tpu.dot_dimension_numbers<[1], [0], [0], [1], [0, 0, 1, 1], [], []>} : vector<16x32xbf16>, vector<32x32xbf16>, vector<16x32xf32> -> vector<16x32xf32>
    %113 = arith.addf %94, %112 : vector<16x32xf32>
    %114 = vector.extract_strided_slice %1 {offsets = [1, 0], sizes = [1, 32], strides = [1, 1]} : vector<3x128xf32> to vector<1x32xf32>
    %115 = vector.broadcast %114 : vector<1x32xf32> to vector<16x32xf32>
    %116 = arith.addf %113, %115 : vector<16x32xf32>
    %cst_54 = arith.constant 0.000000e+00 : f32
    %117 = vector.broadcast %cst_54 : f32 to vector<16x32xf32>
    %118 = arith.maximumf %116, %117 : vector<16x32xf32>
    %119 = arith.truncf %118 : vector<16x32xf32> to vector<16x32xbf16>
    %c0_55 = arith.constant 0 : index
    %c0_56 = arith.constant 0 : index
    %120 = vector.load %arg5[%c0_55, %c0_56] : memref<32x128xbf16, #tpu.memory_space<vmem>>, vector<32x128xbf16>
    %cst_57 = arith.constant dense<0.000000e+00> : vector<16x128xf32>
    %121 = tpu.matmul %119, %120, %cst_57 {dimension_numbers = #tpu.dot_dimension_numbers<[1], [0], [0], [1], [0, 0, 1, 1], [], []>} : vector<16x32xbf16>, vector<32x128xbf16>, vector<16x128xf32> -> vector<16x128xf32>
    %122 = vector.extract_strided_slice %1 {offsets = [2, 0], sizes = [1, 128], strides = [1, 1]} : vector<3x128xf32> to vector<1x128xf32>
    %123 = vector.broadcast %122 : vector<1x128xf32> to vector<16x128xf32>
    %124 = arith.addf %121, %123 : vector<16x128xf32>
    %c0_58 = arith.constant 0 : index
    %c0_59 = arith.constant 0 : index
    %125 = vector.load %arg7[%c0_58, %c0_59] : memref<16x128xf32, #tpu.memory_space<vmem>>, vector<16x128xf32>
    tpu.vector_store %arg7[%c0_58, %c0_59], %124 {strides = array<i32>} : memref<16x128xf32, #tpu.memory_space<vmem>>, vector<16x128xf32>,
    return
  }
  func.func @transform_0(%arg0: i32) -> (i32, i32) {
    %c0_i32 = arith.constant 0 : i32
    %c0_i32_0 = arith.constant 0 : i32
    return %arg0, %c0_i32 : i32, i32
  }
  func.func @transform_1(%arg0: i32) -> (i32, i32, i32) {
    %c0_i32 = arith.constant 0 : i32
    %c0_i32_0 = arith.constant 0 : i32
    %c0_i32_1 = arith.constant 0 : i32
    %c0_i32_2 = arith.constant 0 : i32
    return %c0_i32, %c0_i32_0, %c0_i32_1 : i32, i32, i32
  }
  func.func @transform_2(%arg0: i32) -> (i32, i32, i32) {
    %c0_i32 = arith.constant 0 : i32
    %c0_i32_0 = arith.constant 0 : i32
    %c0_i32_1 = arith.constant 0 : i32
    %c0_i32_2 = arith.constant 0 : i32
    return %c0_i32, %c0_i32_0, %c0_i32_1 : i32, i32, i32
  }
  func.func @transform_3(%arg0: i32) -> (i32, i32) {
    %c0_i32 = arith.constant 0 : i32
    %c0_i32_0 = arith.constant 0 : i32
    %c0_i32_1 = arith.constant 0 : i32
    return %c0_i32, %c0_i32_0 : i32, i32
  }
  func.func @transform_4(%arg0: i32) -> (i32, i32) {
    %c0_i32 = arith.constant 0 : i32
    %c0_i32_0 = arith.constant 0 : i32
    %c0_i32_1 = arith.constant 0 : i32
    return %c0_i32, %c0_i32_0 : i32, i32
  }
  func.func @transform_5(%arg0: i32) -> (i32, i32) {
    %c0_i32 = arith.constant 0 : i32
    %c0_i32_0 = arith.constant 0 : i32
    %c0_i32_1 = arith.constant 0 : i32
    return %c0_i32, %c0_i32_0 : i32, i32
  }
  func.func @transform_6(%arg0: i32) -> (i32, i32) {
    %c0_i32 = arith.constant 0 : i32
    %c0_i32_0 = arith.constant 0 : i32
    return %arg0, %c0_i32 : i32, i32
  }
}

</mosaic_0001>

<llo_original>
// kernel: _lambda_.1
$region0: #{_lambda_.1}
  #allocation0 [shape = 'u32[]', space=smem, size = 0x4, offset = 0x4, fixed_abs, tag = 'smem constant byte address 0x4 - core index']
  #allocation1 [shape = 'u32[72,128]{1,0:T(1,128)}', space=vmem, size = 0x9000, scoped, tag = 'internal scratch']
  %s0 = inlined_call_operand.vmem [shape: f32[32,4], index: 0, kind: input, shape index: {}]
  %s1 = inlined_call_operand.vmem [shape: bf16[3,4,32], index: 1, kind: input, shape index: {}]
  %s2 = inlined_call_operand.hbm [shape: bf16[3,32,32], index: 2, kind: input, shape index: {}]
  %s3 = inlined_call_operand.vmem [shape: bf16[4,32], index: 3, kind: input, shape index: {}]
  %s4 = inlined_call_operand.vmem [shape: bf16[32,128], index: 4, kind: input, shape index: {}]
  %s5 = inlined_call_operand.vmem [shape: f32[3,128], index: 5, kind: input, shape index: {}]
  %s6 = inlined_call_operand.vmem [shape: f32[32,128], index: 6, kind: output, shape index: {}]
  %s7 = sld [smem:[#allocation0]]
  $region61: #{_lambda_.1} parent=0
    _
  %s9 = ssub.s32 1, %s7
  %s10 = scalar_select 0, %s9, %s7
  $region1: #{_lambda_.1} parent=0
    #allocation2 [shape = 'u8[24576]{0}', space=vmem, size = 0x6000, scoped, tag = 'input window, operand 2, single buffered']
    #allocation3 [shape = 's32[2]{0}', space=sflag, size = 0x8, scoped, tag = 'scoped memory for _lambda_.1']
    %11 = vsyncpa [#allocation3], 0
    loop: start=0, step=1, limit=4
    $region2: #{_lambda_.1} parent=1 // loop_pre_header
      _
    $region3: #{_lambda_.1} parent=1 // loop_header
      %s13 = sphi 0, %s17
      %p14 = scmp.ge.s32.totalorder %s13, 4
      %s23 = sphi 0, %s25
      %s26 = sphi 0, %s23
      %s27 = sphi 0, %s26
      %s43 = sphi 0, %s27
      %s47 = sphi 0, %s47
      %s49 = sphi 0, %s47
      %s50 = sphi 0, %s49
      %s64 = sphi 0, %s50
      %s68 = sphi 0, %s68
      %s70 = sphi 0, %s68
      %s71 = sphi 0, %s70
      %s85 = sphi 0, %s71
      %s89 = sphi 0, %s89
      %s91 = sphi 0, %s89
      %s92 = sphi 0, %s91
      %s106 = sphi 0, %s92
      %s110 = sphi 0, %s110
      %s112 = sphi 0, %s110
      %s113 = sphi 0, %s112
      %s127 = sphi 0, %s113
      %s131 = sphi 0, %s131
      %s133 = sphi 0, %s131
      %s134 = sphi 0, %s133
      %s148 = sphi 0, %s134
      %s154 = sphi 0, %s156
      %s157 = sphi 0, %s154
      %s158 = sphi 0, %s157
      %s174 = sphi 0, %s158
    $region4: #{_lambda_.1} parent=1 // loop_header_branch
      %16 = sbr.rel (%p14) target = $region8
    $region5: #{_lambda_.1} parent=1 // loop_body
      %s18 = ssub.s32 %s13, 1
      %s19 = ssub.s32 %s13, 2
      %s20 = sadd.s32 %s13, 1
      %s21 = ssub.s32 %s13, %s20
      %p22 = scmp.eq.s32.totalorder %s21, 0
      %s24 = sadd.s32 %s23, 1
      %s25 = scalar_select %p22, %s23, %s24
      %p28 = pneg %p22
      %p29 = scmp.eq.s32.totalorder %s13, 1
      %p30 = por %p28, %p29
      %p31 = scmp.ne.s32.totalorder %s23, %s26
      %p32 = scmp.eq.s32.totalorder %s13, 0
      %p33 = por %p31, %p32
      %p34 = scmp.ne.s32.totalorder %s23, %s26
      %p35 = scmp.eq.s32.totalorder %s18, 1
      %p36 = por %p34, %p35
      %p37 = scmp.ne.s32.totalorder %s26, %s27
      %p38 = scmp.eq.s32.totalorder %s18, 0
      %p39 = por %p37, %p38
      %p40 = scmp.ne.s32.totalorder %s26, %s27
      %p41 = scmp.eq.s32.totalorder %s19, 1
      %p42 = por %p40, %p41
      %p44 = scmp.ne.s32.totalorder %s27, %s43
      %p45 = scmp.eq.s32.totalorder %s19, 0
      %p46 = por %p44, %p45
      %s48 = sadd.s32 %s47, 1
      %p51 = scmp.eq.s32.totalorder %s13, 1
      %p52 = scmp.ne.s32.totalorder %s47, %s49
      %p53 = scmp.eq.s32.totalorder %s13, 0
      %p54 = por %p52, %p53
      %p55 = scmp.ne.s32.totalorder %s47, %s49
      %p56 = scmp.eq.s32.totalorder %s18, 1
      %p57 = por %p55, %p56
      %p58 = scmp.ne.s32.totalorder %s49, %s50
      %p59 = scmp.eq.s32.totalorder %s18, 0
      %p60 = por %p58, %p59
      %p61 = scmp.ne.s32.totalorder %s49, %s50
      %p62 = scmp.eq.s32.totalorder %s19, 1
      %p63 = por %p61, %p62
      %p65 = scmp.ne.s32.totalorder %s50, %s64
      %p66 = scmp.eq.s32.totalorder %s19, 0
      %p67 = por %p65, %p66
      %s69 = sadd.s32 %s68, 1
      %p72 = scmp.eq.s32.totalorder %s13, 1
      %p73 = scmp.ne.s32.totalorder %s68, %s70
      %p74 = scmp.eq.s32.totalorder %s13, 0
      %p75 = por %p73, %p74
      %p76 = scmp.ne.s32.totalorder %s68, %s70
      %p77 = scmp.eq.s32.totalorder %s18, 1
      %p78 = por %p76, %p77
      %p79 = scmp.ne.s32.totalorder %s70, %s71
      %p80 = scmp.eq.s32.totalorder %s18, 0
      %p81 = por %p79, %p80
      %p82 = scmp.ne.s32.totalorder %s70, %s71
      %p83 = scmp.eq.s32.totalorder %s19, 1
      %p84 = por %p82, %p83
      %p86 = scmp.ne.s32.totalorder %s71, %s85
      %p87 = scmp.eq.s32.totalorder %s19, 0
      %p88 = por %p86, %p87
      %s90 = sadd.s32 %s89, 1
      %p93 = scmp.eq.s32.totalorder %s13, 1
      %p94 = scmp.ne.s32.totalorder %s89, %s91
      %p95 = scmp.eq.s32.totalorder %s13, 0
      %p96 = por %p94, %p95
      %p97 = scmp.ne.s32.totalorder %s89, %s91
      %p98 = scmp.eq.s32.totalorder %s18, 1
      %p99 = por %p97, %p98
      %p100 = scmp.ne.s32.totalorder %s91, %s92
      %p101 = scmp.eq.s32.totalorder %s18, 0
      %p102 = por %p100, %p101
      %p103 = scmp.ne.s32.totalorder %s91, %s92
      %p104 = scmp.eq.s32.totalorder %s19, 1
      %p105 = por %p103, %p104
      %p107 = scmp.ne.s32.totalorder %s92, %s106
      %p108 = scmp.eq.s32.totalorder %s19, 0
      %p109 = por %p107, %p108
      %s111 = sadd.s32 %s110, 1
      %p114 = scmp.eq.s32.totalorder %s13, 1
      %p115 = scmp.ne.s32.totalorder %s110, %s112
      %p116 = scmp.eq.s32.totalorder %s13, 0
      %p117 = por %p115, %p116
      %p118 = scmp.ne.s32.totalorder %s110, %s112
      %p119 = scmp.eq.s32.totalorder %s18, 1
      %p120 = por %p118, %p119
      %p121 = scmp.ne.s32.totalorder %s112, %s113
      %p122 = scmp.eq.s32.totalorder %s18, 0
      %p123 = por %p121, %p122
      %p124 = scmp.ne.s32.totalorder %s112, %s113
      %p125 = scmp.eq.s32.totalorder %s19, 1
      %p126 = por %p124, %p125
      %p128 = scmp.ne.s32.totalorder %s113, %s127
      %p129 = scmp.eq.s32.totalorder %s19, 0
      %p130 = por %p128, %p129
      %s132 = sadd.s32 %s131, 1
      %p135 = scmp.eq.s32.totalorder %s13, 1
      %p136 = scmp.ne.s32.totalorder %s131, %s133
      %p137 = scmp.eq.s32.totalorder %s13, 0
      %p138 = por %p136, %p137
      %p139 = scmp.ne.s32.totalorder %s131, %s133
      %p140 = scmp.eq.s32.totalorder %s18, 1
      %p141 = por %p139, %p140
      %p142 = scmp.ne.s32.totalorder %s133, %s134
      %p143 = scmp.eq.s32.totalorder %s18, 0
      %p144 = por %p142, %p143
      %p145 = scmp.ne.s32.totalorder %s133, %s134
      %p146 = scmp.eq.s32.totalorder %s19, 1
      %p147 = por %p145, %p146
      %p149 = scmp.ne.s32.totalorder %s134, %s148
      %p150 = scmp.eq.s32.totalorder %s19, 0
      %p151 = por %p149, %p150
      %s152 = ssub.s32 %s13, %s20
      %p153 = scmp.eq.s32.totalorder %s152, 0
      %s155 = sadd.s32 %s154, 1
      %s156 = scalar_select %p153, %s154, %s155
      %p159 = pneg %p153
      %p160 = scmp.eq.s32.totalorder %s13, 1
      %p161 = por %p159, %p160
      %p162 = scmp.ne.s32.totalorder %s154, %s157
      %p163 = scmp.eq.s32.totalorder %s13, 0
      %p164 = por %p162, %p163
      %p165 = scmp.ne.s32.totalorder %s154, %s157
      %p166 = scmp.eq.s32.totalorder %s18, 1
      %p167 = por %p165, %p166
      %p168 = scmp.ne.s32.totalorder %s157, %s158
      %p169 = scmp.eq.s32.totalorder %s18, 0
      %p170 = por %p168, %p169
      %p171 = scmp.ne.s32.totalorder %s157, %s158
      %p172 = scmp.eq.s32.totalorder %s19, 1
      %p173 = por %p171, %p172
      %p175 = scmp.ne.s32.totalorder %s158, %s174
      %p176 = scmp.eq.s32.totalorder %s19, 0
      %p177 = por %p175, %p176
      %p178 = scmp.le.s32.totalorder 1, %s13
      %p179 = scmp.lt.s32.totalorder %s13, 3
      %p180 = pnand %p178, %p179
      %p181 = pneg %p180
      // Predicated region
      $region9: #{_lambda_.1} parent=5 // pred_check
        _
      $region10: #{_lambda_.1} parent=5 // pred_check_branch
        %183 = sbr.rel (%p180) target = $region12
      $region11: #{_lambda_.1} parent=5 // pred_region
        %s184 = ssub.s32 %s13, 1
        // Predicated region
        $region13: #{_lambda_.1} parent=11 // pred_check
          %p185 = pneg %p60
        $region14: #{_lambda_.1} parent=11 // pred_check_branch
          %187 = sbr.rel (%p185) target = $region16
        $region15: #{_lambda_.1} parent=11 // pred_region
          _
        $region16: #{_lambda_.1} parent=11 // pred_fallthru
          _
        // Predicated region
        $region17: #{_lambda_.1} parent=11 // pred_check
          %p188 = pneg %p81
        $region18: #{_lambda_.1} parent=11 // pred_check_branch
          %190 = sbr.rel (%p188) target = $region20
        $region19: #{_lambda_.1} parent=11 // pred_region
          %192 = vsyncadd [#allocation3], 0
          %s193 = sshll.u32 %s2, 4
          %s194 = int_to_ptr.hbm [resolvable:$true] %s193
          %s195 = sshll.u32 [#allocation2], 4
          %s196 = int_to_ptr.vmem [resolvable:$true] %s195
          %201 = dma.hbm_to_vmem [thread:$0]  %s194, 768, %s196, [#allocation3], 64, 64, 4
        $region20: #{_lambda_.1} parent=11 // pred_fallthru
          _
        // Predicated region
        $region21: #{_lambda_.1} parent=11 // pred_check
          %p202 = pneg %p102
        $region22: #{_lambda_.1} parent=11 // pred_check_branch
          %204 = sbr.rel (%p202) target = $region24
        $region23: #{_lambda_.1} parent=11 // pred_region
          _
        $region24: #{_lambda_.1} parent=11 // pred_fallthru
          _
        // Predicated region
        $region25: #{_lambda_.1} parent=11 // pred_check
          %p205 = pneg %p123
        $region26: #{_lambda_.1} parent=11 // pred_check_branch
          %207 = sbr.rel (%p205) target = $region28
        $region27: #{_lambda_.1} parent=11 // pred_region
          _
        $region28: #{_lambda_.1} parent=11 // pred_fallthru
          _
        // Predicated region
        $region29: #{_lambda_.1} parent=11 // pred_check
          %p208 = pneg %p144
        $region30: #{_lambda_.1} parent=11 // pred_check_branch
          %210 = sbr.rel (%p208) target = $region32
        $region31: #{_lambda_.1} parent=11 // pred_region
          _
        $region32: #{_lambda_.1} parent=11 // pred_fallthru
          _
      $region12: #{_lambda_.1} parent=5 // pred_fallthru
        _
      %p211 = scmp.lt.s32.totalorder %s13, 2
      // Predicated region
      $region33: #{_lambda_.1} parent=5 // pred_check
        %p212 = pneg %p211
      $region34: #{_lambda_.1} parent=5 // pred_check_branch
        %214 = sbr.rel (%p212) target = $region36
      $region35: #{_lambda_.1} parent=5 // pred_region
        // Predicated region
        $region37: #{_lambda_.1} parent=35 // pred_check
          %p215 = pneg %p33
        $region38: #{_lambda_.1} parent=35 // pred_check_branch
          %217 = sbr.rel (%p215) target = $region40
        $region39: #{_lambda_.1} parent=35 // pred_region
          %s218 = smul.u32 2, %s13
          %p219 = scmp.lt.s32.totalorder %s218, 3
          %s220 = scalar_select %p219, %s218, 3
          %s221 = smul.addr %s220, 8
          %s222 = scalar_lea.vmem %s0, %s221
          %s223 = smul.u32 2, %s13
        $region40: #{_lambda_.1} parent=35 // pred_fallthru
          _
      $region36: #{_lambda_.1} parent=5 // pred_fallthru
        _
      %p224 = scmp.le.s32.totalorder 1, %s13
      %p225 = scmp.lt.s32.totalorder %s13, 3
      %p226 = pnand %p224, %p225
      %p227 = pneg %p226
      // Predicated region
      $region41: #{_lambda_.1} parent=5 // pred_check
        _
      $region42: #{_lambda_.1} parent=5 // pred_check_branch
        %229 = sbr.rel (%p226) target = $region44
      $region43: #{_lambda_.1} parent=5 // pred_region
        %s230 = ssub.s32 %s13, 1
        // Predicated region
        $region45: #{_lambda_.1} parent=43 // pred_check
          %p231 = pneg %p81
        $region46: #{_lambda_.1} parent=43 // pred_check_branch
          %233 = sbr.rel (%p231) target = $region48
        $region47: #{_lambda_.1} parent=43 // pred_region
          %235 = dma.done [#allocation3], 768
        $region48: #{_lambda_.1} parent=43 // pred_fallthru
          _
        %s236 = smul.u32 2, %s18
        %p237 = scmp.lt.s32.totalorder %s236, 3
        %s238 = scalar_select %p237, %s236, 3
        %s239 = smul.addr %s238, 8
        %s240 = scalar_lea.vmem %s0, %s239
        %p241 = pneg %p39
        %p242 = pneg %p36
        %p243 = pneg %p60
        %p244 = pneg %p57
        %p245 = pneg %p81
        %p246 = pneg %p78
        %p247 = pneg %p102
        %p248 = pneg %p99
        %p249 = pneg %p123
        %p250 = pneg %p120
        %p251 = pneg %p144
        %p252 = pneg %p141
        %p253 = pneg %p170
        %p254 = pneg %p167
        %s255 = smul.u32 2, %s18
        %p256 = scmp.lt.s32.totalorder %s255, 3
        %s257 = scalar_select %p256, %s255, 3
        %s258 = smul.addr %s257, 8
        %s259 = scalar_lea.vmem %s6, %s258
        %s260 = smul.u32 2, %s18
        %p261 = scmp.lt.s32.totalorder %s260, 3
        %s262 = scalar_select %p261, %s260, 3
        %s263 = smul.addr %s262, 8
        %s264 = scalar_lea.vmem %s0, %s263
        %s265 = smul.u32 2, %s18
        %s266 = smul.u32 2, %s18
        %p267 = scmp.lt.s32.totalorder %s266, 3
        %s268 = scalar_select %p267, %s266, 3
        %s269 = smul.addr %s268, 8
        %s270 = scalar_lea.vmem %s6, %s269
        %s271 = smul.u32 2, %s18
        %v273 = vld [vmem:[%s264] sm:$0xff]
        %v274 = vld [vmem:[%s264 + $0x8] sm:$0xff]
        %v275 = vld [vmem:[%s5] sm:$0x7]
        %v276 = vlaneseq
        %v277 = vshrl.u32 %v276, 7
        %v278 = vadd.s32 %v277, 8
        %vm279 = vcmp.lt.s32.totalorder %v277, 0
        %v280 = vsub.s32 0, %v277
        %v281 = vsel %vm279, %v280, %v277
        %v282 = vshrl.u32 %v281, 4
        %v283 = vand.u32 %v281, 15
        %v284 = vsub.s32 0, %v283
        %v285 = vsel %vm279, %v284, %v283
        %vm286 = vcmp.lt.s32.totalorder %v278, 0
        %v287 = vsub.s32 0, %v278
        %v288 = vsel %vm286, %v287, %v278
        %v289 = vshrl.u32 %v288, 4
        %v290 = vand.u32 %v288, 15
        %v291 = vsub.s32 0, %v290
        %v292 = vsel %vm286, %v291, %v290
        %vm293 = vcmp.ne.s32.totalorder %v285, 0
        %vm294 = vcmp.ne.s32.totalorder %v292, 0
        %vm295 = vcmp.lt.s32.totalorder %v285, 0
        %vm296 = vcmp.lt.s32.totalorder %v292, 0
        %vm297 = vmand %vm295, %vm293
        %vm298 = vmand %vm296, %vm294
        %v299 = vadd.s32 %v285, 16
        %v300 = vadd.s32 %v292, 16
        %v301 = vsel %vm297, %v299, %v285
        %v302 = vsel %vm298, %v300, %v292
        %v303 = vrot.slane %v273, 7
        %v304 = vrot.slane %v274, 7
        %vm305 = vcmp.lt.s32.totalorder %v277, 1
        %v306 = vsel %vm305, %v303, %v304
        %v307 = vsel %vm305, %v304, %v303
        %v308 = vadd.s32 %v301, 4294967295
        %v309 = vadd.s32 %v302, 4294967295
        %vm310 = vcmp.ge.s32.totalorder %v308, 0
        %vm311 = vcmp.ge.s32.totalorder %v309, 0
        %vm312 = vcmp.lt.s32.totalorder %v308, 16
        %vm313 = vcmp.lt.s32.totalorder %v309, 16
        %vm314 = vmand %vm310, %vm312
        %vm315 = vmand %vm311, %vm313
        %v316 = vsel %vm314, 1, 0
        %v317 = vsel %vm315, 1, 0
        %vm318 = vcmp.eq.s32.totalorder %v316, 1
        %vm319 = vcmp.eq.s32.totalorder %v317, 1
        %v320 = vsel %vm318, %v307, 0.0
        %v321 = vsel %vm319, %v306, 0.0
        %v322 = vpack.c.bf16 %v321, %v320
        %v323 = vld [vmem:[%s1] sm:$0x3]
        %v324 = vpack.c.bf16 %v274, %v273
        %s325 = scalar_lea.vmem %s1, 2
        %v326 = vld [vmem:[%s325] sm:$0x3]
        %vm327 = vcmask 31744
        %v329 = vsel %vm327, %v324, 0
        %vm331 = vcmask 1041408
        %v333 = vsel %vm331, %v326, 0
        %335 = vmatpush.bf16.msra.mxu0 0
        %336 = vmatpush.bf16.msra.mxu0 0
        %337 = vmatpush.bf16.msra.mxu0 0
        %338 = vmatpush.bf16.msra.mxu0 0
        %339 = vmatpush.bf16.msra.mxu0 0
        %340 = vmatpush.bf16.msra.mxu0 0
        %341 = vmatpush.bf16.msra.mxu0 0
        %342 = vmatpush.bf16.msra.mxu0 %v333
        %343 = vmatmul.bf16.gmra.mxu0 %v329
        %v344 = vpop.f32.mrf.mxu0
        %v345 = vadd.f32 0.0, %v344
        %v346 = vpop.f32.mrf.mxu0
        %v347 = vadd.f32 0.0, %v346
        %348 = vdwg.mxu0
        %v350 = vsel %vm327, %v322, 0
        %v353 = vsel %vm331, %v323, 0
        %355 = vmatpush.bf16.msra.mxu0 0
        %356 = vmatpush.bf16.msra.mxu0 0
        %357 = vmatpush.bf16.msra.mxu0 0
        %358 = vmatpush.bf16.msra.mxu0 0
        %359 = vmatpush.bf16.msra.mxu0 0
        %360 = vmatpush.bf16.msra.mxu0 0
        %361 = vmatpush.bf16.msra.mxu0 0
        %362 = vmatpush.bf16.msra.mxu0 %v353
        %363 = vmatmul.bf16.gmra.mxu0 %v350
        %v364 = vpop.f32.mrf.mxu0
        %v365 = vadd.f32 %v345, %v364
        %v366 = vpop.f32.mrf.mxu0
        %v367 = vadd.f32 %v347, %v366
        %368 = vdwg.mxu0
        %v369 = vrot.slane %v273, 1
        %v370 = vrot.slane %v274, 1
        %vm371 = vcmp.lt.s32.totalorder %v277, 7
        %v372 = vsel %vm371, %v369, %v370
        %v373 = vsel %vm371, %v370, %v369
        %v374 = vadd.s32 %v301, 1
        %v375 = vadd.s32 %v302, 1
        %vm376 = vcmp.ge.s32.totalorder %v374, 0
        %vm377 = vcmp.ge.s32.totalorder %v375, 0
        %vm378 = vcmp.lt.s32.totalorder %v374, 16
        %vm379 = vcmp.lt.s32.totalorder %v375, 16
        %vm380 = vmand %vm376, %vm378
        %vm381 = vmand %vm377, %vm379
        %v382 = vsel %vm380, 1, 0
        %v383 = vsel %vm381, 1, 0
        %vm384 = vcmp.eq.s32.totalorder %v382, 1
        %vm385 = vcmp.eq.s32.totalorder %v383, 1
        %v386 = vsel %vm384, %v372, 0.0
        %v387 = vsel %vm385, %v373, 0.0
        %v388 = vpack.c.bf16 %v387, %v386
        %s389 = scalar_lea.vmem %s1, 4
        %v390 = vld [vmem:[%s389] sm:$0x3]
        %v392 = vsel %vm327, %v388, 0
        %v395 = vsel %vm331, %v390, 0
        %397 = vmatpush.bf16.msra.mxu0 0
        %398 = vmatpush.bf16.msra.mxu0 0
        %399 = vmatpush.bf16.msra.mxu0 0
        %400 = vmatpush.bf16.msra.mxu0 0
        %401 = vmatpush.bf16.msra.mxu0 0
        %402 = vmatpush.bf16.msra.mxu0 0
        %403 = vmatpush.bf16.msra.mxu0 0
        %404 = vmatpush.bf16.msra.mxu0 %v395
        %405 = vmatmul.bf16.gmra.mxu0 %v392
        %v406 = vpop.f32.mrf.mxu0
        %v407 = vadd.f32 0.0, %v406
        %v408 = vpop.f32.mrf.mxu0
        %v409 = vadd.f32 0.0, %v408
        %410 = vdwg.mxu0
        %v411 = vadd.f32 %v365, %v407
        %v412 = vadd.f32 %v367, %v409
        %v413 = vperm.slane %v275, 0
        %v414 = vadd.f32 %v411, %v413
        %v415 = vadd.f32 %v412, %v413
        %v416 = vmax.f32 %v414, 0.0
        %v417 = vmax.f32 %v415, 0.0
        %v418 = vld [vmem:[%s3] sm:$0x3]
        %v419 = vrot.slane %v416, 7
        %v420 = vrot.slane %v417, 7
        %v421 = vsel %vm305, %v419, %v420
        %v422 = vsel %vm305, %v420, %v419
        %v423 = vsel %vm318, %v422, 0.0
        %v424 = vsel %vm319, %v421, 0.0
        %v425 = vpack.c.bf16 %v424, %v423
        %v426 = vld [vmem:[#allocation2] sm:$0xf]
        %v427 = vld [vmem:[#allocation2 + $0x4] sm:$0xf]
        %v428 = vld [vmem:[#allocation2 + $0x8] sm:$0xf]
        %v429 = vld [vmem:[#allocation2 + $0xc] sm:$0xf]
        %v434 = vunpack.c.l.b16 %v426
        %v435 = vunpack.c.l.b16 %v427
        %v436 = vunpack.c.l.b16 %v428
        %v437 = vunpack.c.l.b16 %v429
        %v438 = vpack.c.b16 %v435, %v434
        %v439 = vpack.c.b16 %v437, %v436
        %vm442 = vcmask 261120
        %v444 = vsel %vm442, %v425, 0
        %446 = vmatpush.bf16.msra.mxu0 0
        %447 = vmatpush.bf16.msra.mxu0 0
        %448 = vmatpush.bf16.msra.mxu0 0
        %449 = vmatpush.bf16.msra.mxu0 0
        %450 = vmatpush.bf16.msra.mxu0 0
        %451 = vmatpush.bf16.msra.mxu0 0
        %452 = vmatpush.bf16.msra.mxu0 %v439
        %453 = vmatpush.bf16.msra.mxu0 %v438
        %454 = vmatmul.bf16.gmra.mxu0 %v444
        %v455 = vpop.f32.mrf.mxu0
        %v456 = vadd.f32 0.0, %v455
        %v457 = vpop.f32.mrf.mxu0
        %v458 = vadd.f32 0.0, %v457
        %459 = vdwg.mxu0
        %v461 = vsel %vm331, %v418, 0
        %463 = vmatpush.bf16.msra.mxu0 0
        %464 = vmatpush.bf16.msra.mxu0 0
        %465 = vmatpush.bf16.msra.mxu0 0
        %466 = vmatpush.bf16.msra.mxu0 0
        %467 = vmatpush.bf16.msra.mxu0 0
        %468 = vmatpush.bf16.msra.mxu0 0
        %469 = vmatpush.bf16.msra.mxu0 0
        %470 = vmatpush.bf16.msra.mxu0 %v461
        %471 = vmatmul.bf16.gmra.mxu0 %v329
        %v472 = vpop.f32.mrf.mxu0
        %v473 = vadd.f32 %v456, %v472
        %v474 = vpop.f32.mrf.mxu0
        %v475 = vadd.f32 %v458, %v474
        %476 = vdwg.mxu0
        %v477 = vpack.c.bf16 %v417, %v416
        %s478 = scalar_lea.vmem [#allocation2], 16
        %v479 = vld [vmem:[%s478] sm:$0xf]
        %v480 = vld [vmem:[%s478 + $0x4] sm:$0xf]
        %v481 = vld [vmem:[%s478 + $0x8] sm:$0xf]
        %v482 = vld [vmem:[%s478 + $0xc] sm:$0xf]
        %v487 = vunpack.c.l.b16 %v479
        %v488 = vunpack.c.l.b16 %v480
        %v489 = vunpack.c.l.b16 %v481
        %v490 = vunpack.c.l.b16 %v482
        %v491 = vpack.c.b16 %v488, %v487
        %v492 = vpack.c.b16 %v490, %v489
        %v496 = vsel %vm442, %v477, 0
        %498 = vmatpush.bf16.msra.mxu0 0
        %499 = vmatpush.bf16.msra.mxu0 0
        %500 = vmatpush.bf16.msra.mxu0 0
        %501 = vmatpush.bf16.msra.mxu0 0
        %502 = vmatpush.bf16.msra.mxu0 0
        %503 = vmatpush.bf16.msra.mxu0 0
        %504 = vmatpush.bf16.msra.mxu0 %v492
        %505 = vmatpush.bf16.msra.mxu0 %v491
        %506 = vmatmul.bf16.gmra.mxu0 %v496
        %v507 = vpop.f32.mrf.mxu0
        %v508 = vadd.f32 0.0, %v507
        %v509 = vpop.f32.mrf.mxu0
        %v510 = vadd.f32 0.0, %v509
        %511 = vdwg.mxu0
        %v512 = vadd.f32 %v473, %v508
        %v513 = vadd.f32 %v475, %v510
        %v514 = vrot.slane %v416, 1
        %v515 = vrot.slane %v417, 1
        %v516 = vsel %vm371, %v514, %v515
        %v517 = vsel %vm371, %v515, %v514
        %v518 = vsel %vm384, %v516, 0.0
        %v519 = vsel %vm385, %v517, 0.0
        %v520 = vpack.c.bf16 %v519, %v518
        %s521 = scalar_lea.vmem [#allocation2], 32
        %v522 = vld [vmem:[%s521] sm:$0xf]
        %v523 = vld [vmem:[%s521 + $0x4] sm:$0xf]
        %v524 = vld [vmem:[%s521 + $0x8] sm:$0xf]
        %v525 = vld [vmem:[%s521 + $0xc] sm:$0xf]
        %v530 = vunpack.c.l.b16 %v522
        %v531 = vunpack.c.l.b16 %v523
        %v532 = vunpack.c.l.b16 %v524
        %v533 = vunpack.c.l.b16 %v525
        %v534 = vpack.c.b16 %v531, %v530
        %v535 = vpack.c.b16 %v533, %v532
        %v539 = vsel %vm442, %v520, 0
        %541 = vmatpush.bf16.msra.mxu0 0
        %542 = vmatpush.bf16.msra.mxu0 0
        %543 = vmatpush.bf16.msra.mxu0 0
        %544 = vmatpush.bf16.msra.mxu0 0
        %545 = vmatpush.bf16.msra.mxu0 0
        %546 = vmatpush.bf16.msra.mxu0 0
        %547 = vmatpush.bf16.msra.mxu0 %v535
        %548 = vmatpush.bf16.msra.mxu0 %v534
        %549 = vmatmul.bf16.gmra.mxu0 %v539
        %v550 = vpop.f32.mrf.mxu0
        %v551 = vadd.f32 0.0, %v550
        %v552 = vpop.f32.mrf.mxu0
        %v553 = vadd.f32 0.0, %v552
        %554 = vdwg.mxu0
        %v555 = vadd.f32 %v512, %v551
        %v556 = vadd.f32 %v513, %v553
        %v557 = vperm.slane %v275, 1
        %v558 = vadd.f32 %v555, %v557
        %v559 = vadd.f32 %v556, %v557
        %v560 = vmax.f32 %v558, 0.0
        %v561 = vmax.f32 %v559, 0.0
        %v562 = vpack.c.bf16 %v561, %v560
        %v563 = vld [vmem:[%s4] sm:$0xf]
        %v564 = vld [vmem:[%s4 + $0x4] sm:$0xf]
        %v565 = vld [vmem:[%s4 + $0x8] sm:$0xf]
        %v566 = vld [vmem:[%s4 + $0xc] sm:$0xf]
        %v567 = vperm.slane %v275, 2
        %v572 = vunpack.c.l.b16 %v563
        %v573 = vunpack.c.l.b16 %v564
        %v574 = vunpack.c.l.b16 %v565
        %v575 = vunpack.c.l.b16 %v566
        %v576 = vpack.c.b16 %v573, %v572
        %v577 = vpack.c.b16 %v575, %v574
        %v581 = vsel %vm442, %v562, 0
        %583 = vmatpush.bf16.msra.mxu0 0
        %584 = vmatpush.bf16.msra.mxu0 0
        %585 = vmatpush.bf16.msra.mxu0 0
        %586 = vmatpush.bf16.msra.mxu0 0
        %587 = vmatpush.bf16.msra.mxu0 0
        %588 = vmatpush.bf16.msra.mxu0 0
        %589 = vmatpush.bf16.msra.mxu0 %v577
        %590 = vmatpush.bf16.msra.mxu0 %v576
        %591 = vmatmul.bf16.gmra.mxu0 %v581
        %v592 = vpop.f32.mrf.mxu0
        %v593 = vadd.f32 %v567, %v592
        %v594 = vpop.f32.mrf.mxu0
        %v595 = vadd.f32 %v567, %v594
        %596 = vdwg.mxu0
        %597 = vst [vmem:[%s270] sm:$0xff] %v593
        %598 = vst [vmem:[%s270 + $0x8] sm:$0xff] %v595
        %s599 = smul.u32 2, %s18
        %p600 = scmp.lt.s32.totalorder %s599, 3
        %s601 = scalar_select %p600, %s599, 3
        %s602 = smul.addr %s601, 8
        %s603 = scalar_lea.vmem %s6, %s602
        // Predicated region
        $region49: #{_lambda_.1} parent=43 // pred_check
          %p604 = pneg %p167
        $region50: #{_lambda_.1} parent=43 // pred_check_branch
          %606 = sbr.rel (%p604) target = $region52
        $region51: #{_lambda_.1} parent=43 // pred_region
          %s607 = smul.u32 2, %s18
        $region52: #{_lambda_.1} parent=43 // pred_fallthru
          _
      $region44: #{_lambda_.1} parent=5 // pred_fallthru
        _
      %p608 = scmp.le.s32.totalorder 2, %s13
      // Predicated region
      $region53: #{_lambda_.1} parent=5 // pred_check
        %p609 = pneg %p608
      $region54: #{_lambda_.1} parent=5 // pred_check_branch
        %611 = sbr.rel (%p609) target = $region56
      $region55: #{_lambda_.1} parent=5 // pred_region
        %s612 = ssub.s32 %s13, 2
        // Predicated region
        $region57: #{_lambda_.1} parent=55 // pred_check
          %p613 = pneg %p173
        $region58: #{_lambda_.1} parent=55 // pred_check_branch
          %615 = sbr.rel (%p613) target = $region60
        $region59: #{_lambda_.1} parent=55 // pred_region
          %s616 = smul.u32 2, %s19
          %p617 = scmp.lt.s32.totalorder %s616, 3
          %s618 = scalar_select %p617, %s616, 3
          %s619 = smul.addr %s618, 8
          %s620 = scalar_lea.vmem %s6, %s619
        $region60: #{_lambda_.1} parent=55 // pred_fallthru
          _
      $region56: #{_lambda_.1} parent=5 // pred_fallthru
        _
    $region6: #{_lambda_.1} parent=1 // loop_footer
      %s17 = sadd.s32 1, %s13
    $region7: #{_lambda_.1} parent=1 // loop_footer_branch
      %12 = sbr.rel target = $region3
    $region8: #{_lambda_.1} parent=1 // loop_exit
      _
    %621 = vsyncpa [#allocation3], 1
    %s622 = scalar_lea.sflag [#allocation3], 1
    %623 = vsyncpa %s622, 1

</llo_original>
